<compile_context>
chip_gen: v7x
topology: tpu7x:2x2x1
jax: 0.10.0
libtpu: 0.0.40
codegen_flags: <defaults>
</compile_context>

<pallas_src>
import functools

import jax
import jax.numpy as jnp
from jax.experimental import pallas as pl
from jax.experimental.pallas import tpu as pltpu

ALPHA = 1.0
GAMMA = 2.0


def _focal_loss_kernel(logits_ref, targets_ref, out_ref, *, n_total, tile_n):
    # logits_ref: (TN, C) in VMEM (original dtype), targets_ref: (TN, 1) int32,
    # out_ref: (1, 128) f32 partial-sum row for this tile.
    i = pl.program_id(0)

    x = logits_ref[...]                                  # (TN, C) native dtype
    t = targets_ref[...]                                 # (TN, 1) int32
    tn, c = x.shape

    # Row max in the native dtype (max is exact in bf16), then upcast once for exp.
    m = jnp.max(x, axis=-1, keepdims=True)               # (TN, 1)
    z = x.astype(jnp.float32) - m.astype(jnp.float32)    # (TN, C) f32, shifted

    # Numerically stable log-sum-exp along the class (lane) axis.
    lse = jnp.log(jnp.sum(jnp.exp(z), axis=-1, keepdims=True))  # (TN, 1)

    # Target (shifted) logit via select + row-sum. The class iota is built (1, C) and
    # broadcast against t, avoiding a full (TN, C) int32 iota materialization.
    cls = jax.lax.broadcasted_iota(jnp.int32, (1, c), 1)         # (1, C)
    z_t = jnp.sum(jnp.where(cls == t, z, 0.0), axis=-1, keepdims=True)  # (TN, 1)
    ce = lse - z_t                                               # (TN, 1) = -log p_t

    # Focal weighting: alpha * (1 - pt)^gamma * ce.
    pt = jnp.exp(-ce)
    omp = 1.0 - pt
    if GAMMA == 2.0:
        w = omp * omp                # specialized: no float pow
    elif GAMMA == 1.0:
        w = omp
    else:
        w = jnp.power(omp, GAMMA)    # general path (EUP)
    focal = ALPHA * w * ce                                       # (TN, 1)

    def _write(vals):
        # Per-tile partial sum broadcast across a full 128-lane row (unmasked store).
        out_ref[...] = jnp.full(out_ref.shape, jnp.sum(vals), dtype=jnp.float32)

    if n_total % tile_n == 0:
        _write(focal)
    else:
        # Only the last tile can overrun the batch; gate the masking work with pl.when
        # so interior tiles skip it entirely. Keep jnp.where (not multiply-by-mask) so
        # NaN/Inf from garbage padding rows cannot leak into the tile sum.
        last = pl.num_programs(0) - 1

        @pl.when(i < last)
        def _():
            _write(focal)

        @pl.when(i == last)
        def _():
            row = jax.lax.broadcasted_iota(jnp.int32, (tn, 1), 0) + i * tile_n
            _write(jnp.where(row < n_total, focal, 0.0))


def _choose_tile_n(n, c, itemsize):
    """Pick the largest sublane-aligned batch tile that fits a ~24 MiB working set.

    Per-row cost model (bytes):
      * logits block, double-buffered:        2 * C * itemsize
      * targets (TN, 1) lane-padded, 2 bufs:  2 * 512
      * in-kernel f32 temporaries (x_f32, z, exp(z), select): ~4 * C * 4
    """
    logits_row = c * itemsize
    targets_row_padded = 512
    f32_temps_row = 4 * c * 4
    per_row = 2 * logits_row + 2 * targets_row_padded + f32_temps_row

    budget_bytes = 24 * 1024 * 1024          # well under the 48 MiB scoped-VMEM limit
    tn = budget_bytes // per_row

    n_pad = ((n + 7) // 8) * 8               # no point tiling wider than the batch
    tn = min(tn, n_pad)

    # Keep at least ~4 tiles when the batch is large enough so both v7x TensorCores
    # (and grid pipelining in general) get work.
    min_tiles = 4
    if n_pad >= min_tiles * 8:
        cap = (((n + min_tiles - 1) // min_tiles + 7) // 8) * 8
        tn = min(tn, cap)

    tn = max(8, (tn // 8) * 8)               # sublane-aligned block first dim
    return int(tn)


def focal_loss(logits, targets):
    """logits: (N, C) float (any float dtype); targets: (N,) int. Returns scalar mean focal loss."""
    n, c = logits.shape
    targets_2d = targets.reshape(n, 1).astype(jnp.int32)

    tile_n = _choose_tile_n(n, c, jnp.dtype(logits.dtype).itemsize)
    num_tiles = int(pl.cdiv(n, tile_n))

    kernel = functools.partial(_focal_loss_kernel, n_total=n, tile_n=tile_n)

    # Class axis kept as a full-extent block (C equals the full array dim, so the
    # (8,128) rule is satisfied without host-side padding). Logits stay in their
    # original dtype (no f32 pre-cast) to keep HBM reads minimal.
    partial_sums = pl.pallas_call(
        kernel,
        out_shape=jax.ShapeDtypeStruct((num_tiles, 128), jnp.float32),
        grid=(num_tiles,),
        in_specs=[
            pl.BlockSpec((tile_n, c), lambda i: (i, 0)),
            pl.BlockSpec((tile_n, 1), lambda i: (i, 0)),
        ],
        out_specs=pl.BlockSpec((1, 128), lambda i: (i, 0)),
        compiler_params=pltpu.CompilerParams(
            dimension_semantics=("parallel",),   # independent tiles -> megacore-shardable
            vmem_limit_bytes=48 * 1024 * 1024,
        ),
    )(logits, targets_2d)

    # Tiny final reduction in plain JAX; divide by the global N (reduction='mean').
    return jnp.sum(partial_sums[:, 0]) / jnp.float32(n)


def focal_loss_ref(logits, targets):
    """Plain-JAX reference (matches F.cross_entropy + focal weighting + mean)."""
    logp = jax.nn.log_softmax(logits.astype(jnp.float32), axis=-1)
    ce = -jnp.take_along_axis(logp, targets[:, None].astype(jnp.int32), axis=-1)[:, 0]
    pt = jnp.exp(-ce)
    focal = ALPHA * (1.0 - pt) ** GAMMA * ce
    return jnp.mean(focal)


if __name__ == "__main__":
    key = jax.random.PRNGKey(0)
    k1, k2 = jax.random.split(key)

    N, C = 8, 32  # small batch, 32 classes
    logits = jax.random.normal(k1, (N, C), dtype=jnp.float32)
    targets = jax.random.randint(k2, (N,), 0, C, dtype=jnp.int32)

    out = focal_loss(logits, targets)
    out = jax.block_until_ready(out)

    ref = focal_loss_ref(logits, targets)
    assert jnp.allclose(out, ref, rtol=1e-5, atol=1e-5), (out, ref)

    print("KERNEL_OK")
</pallas_src>

<mosaic_0001>
module attributes {stable_mosaic.version = 11 : i64} {
  func.func @_focal_loss_kernel(%arg0: i32, %arg1: memref<8x32xf32, #tpu.memory_space<vmem>>, %arg2: memref<8x1xi32, #tpu.memory_space<vmem>>, %arg3: memref<1x128xf32, #tpu.memory_space<vmem>>) attributes {dimension_semantics = [#tpu.dimension_semantics<parallel>], iteration_bounds = array<i64: 1>, scalar_prefetch = 0 : i64, scratch_operands = 0 : i64, tpu.core_type = #tpu.core_type<tc>, window_params = [{transform_indices = @transform_0, window_bounds = array<i64: 8, 32>}, {transform_indices = @transform_1, window_bounds = array<i64: 8, 1>}, {transform_indices = @transform_2, window_bounds = array<i64: 1, 128>}]} {
    %c0 = arith.constant 0 : index
    %c0_0 = arith.constant 0 : index
    %0 = vector.load %arg1[%c0, %c0_0] : memref<8x32xf32, #tpu.memory_space<vmem>>, vector<8x32xf32>
    %c0_1 = arith.constant 0 : index
    %c0_2 = arith.constant 0 : index
    %1 = vector.load %arg2[%c0_1, %c0_2] : memref<8x1xi32, #tpu.memory_space<vmem>>, vector<8x1xi32>
    %cst = arith.constant dense<0xFF800000> : vector<8xf32>
    %2 = vector.multi_reduction <maximumf>, %0, %cst [1] : vector<8x32xf32> to vector<8xf32>
    %3 = vector.shape_cast %2 : vector<8xf32> to vector<8x1xf32>
    %4 = vector.broadcast %3 : vector<8x1xf32> to vector<8x32xf32>
    %5 = arith.subf %0, %4 : vector<8x32xf32>
    %6 = math.exp %5 : vector<8x32xf32>
    %cst_3 = arith.constant dense<0.000000e+00> : vector<8xf32>
    %7 = vector.multi_reduction <add>, %6, %cst_3 [1] : vector<8x32xf32> to vector<8xf32>
    %8 = vector.shape_cast %7 : vector<8xf32> to vector<8x1xf32>
    %9 = math.log %8 : vector<8x1xf32>
    %10 = tpu.iota {dimensions = array<i32: 1>} : vector<1x32xi32>
    %11 = vector.broadcast %10 : vector<1x32xi32> to vector<8x32xi32>
    %12 = vector.broadcast %1 : vector<8x1xi32> to vector<8x32xi32>
    %13 = arith.cmpi eq, %11, %12 : vector<8x32xi32>
    %cst_4 = arith.constant 0.000000e+00 : f32
    %14 = vector.broadcast %cst_4 : f32 to vector<8x32xf32>
    %15 = arith.select %13, %5, %14 : vector<8x32xi1>, vector<8x32xf32>
    %cst_5 = arith.constant dense<0.000000e+00> : vector<8xf32>
    %16 = vector.multi_reduction <add>, %15, %cst_5 [1] : vector<8x32xf32> to vector<8xf32>
    %17 = vector.shape_cast %16 : vector<8xf32> to vector<8x1xf32>
    %18 = arith.subf %9, %17 : vector<8x1xf32>
    %cst_6 = arith.constant 0.000000e+00 : f32
    %19 = vector.broadcast %cst_6 : f32 to vector<8x1xf32>
    %20 = arith.subf %19, %18 : vector<8x1xf32>
    %21 = math.exp %20 : vector<8x1xf32>
    %cst_7 = arith.constant 1.000000e+00 : f32
    %22 = vector.broadcast %cst_7 : f32 to vector<8x1xf32>
    %23 = arith.subf %22, %21 : vector<8x1xf32>
    %24 = arith.mulf %23, %23 : vector<8x1xf32>
    %cst_8 = arith.constant 1.000000e+00 : f32
    %25 = vector.broadcast %cst_8 : f32 to vector<8x1xf32>
    %26 = arith.mulf %25, %24 : vector<8x1xf32>
    %27 = arith.mulf %26, %18 : vector<8x1xf32>
    %28 = vector.shape_cast %27 : vector<8x1xf32> to vector<1x8x1xf32>
    %cst_9 = arith.constant dense<0.000000e+00> : vector<1xf32>
    %29 = vector.multi_reduction <add>, %28, %cst_9 [1, 2] : vector<1x8x1xf32> to vector<1xf32>
    %30 = vector.shape_cast %29 : vector<1xf32> to vector<1x1x1xf32>
    %31 = vector.extract %30[0, 0, 0] : f32 from vector<1x1x1xf32>
    %32 = vector.broadcast %31 : f32 to vector<1x128xf32>
    %c0_10 = arith.constant 0 : index
    %c0_11 = arith.constant 0 : index
    %33 = vector.load %arg3[%c0_10, %c0_11] : memref<1x128xf32, #tpu.memory_space<vmem>>, vector<1x128xf32>
    tpu.vector_store %arg3[%c0_10, %c0_11], %32 {strides = array<i32>} : memref<1x128xf32, #tpu.memory_space<vmem>>, vector<1x128xf32>,
    return
  }
  func.func @transform_0(%arg0: i32) -> (i32, i32) {
    %c0_i32 = arith.constant 0 : i32
    %c0_i32_0 = arith.constant 0 : i32
    return %arg0, %c0_i32 : i32, i32
  }
  func.func @transform_1(%arg0: i32) -> (i32, i32) {
    %c0_i32 = arith.constant 0 : i32
    %c0_i32_0 = arith.constant 0 : i32
    return %arg0, %c0_i32 : i32, i32
  }
  func.func @transform_2(%arg0: i32) -> (i32, i32) {
    %c0_i32 = arith.constant 0 : i32
    %c0_i32_0 = arith.constant 0 : i32
    return %arg0, %c0_i32 : i32, i32
  }
}

</mosaic_0001>

<llo_original>
// kernel: tpu_custom_call.1
$region0: #{tpu_custom_call.1}
  #allocation0 [shape = 'u32[]', space=smem, size = 0x4, offset = 0x4, fixed_abs, tag = 'smem constant byte address 0x4 - core index']
  #allocation1 [shape = 'u32[144,128]{1,0:T(1,128)}', space=vmem, size = 0x12000, scoped, tag = 'internal scratch']
  %s0 = inlined_call_operand.vmem [shape: f32[8,32], index: 0, kind: input, shape index: {}]
  %s1 = inlined_call_operand.vmem [shape: s32[8,1], index: 1, kind: input, shape index: {}]
  %s2 = inlined_call_operand.hbm [shape: f32[1,128], index: 2, kind: output, shape index: {}]
  %s3 = sld [smem:[#allocation0]]
  $region18: #{tpu_custom_call.1} parent=0
    _
  %s5 = ssub.s32 1, %s3
  %s6 = scalar_select 0, %s5, %s3
  $region1: #{tpu_custom_call.1} parent=0
    #allocation2 [shape = 'u8[512]{0}', space=vmem, size = 0x400, scoped, tag = 'output window, operand 0, single buffered']
    #allocation3 [shape = 's32[1]{0}', space=sflag, size = 0x4, scoped, tag = 'scoped memory for tpu_custom_call.1']
    %7 = vsyncpa [#allocation3], 0
    // Predicated region
    $region2: #{tpu_custom_call.1} parent=1 // pred_check
      _
    $region3: #{tpu_custom_call.1} parent=1 // pred_check_branch
      %9 = sbr.rel (0) target = $region5
    $region4: #{tpu_custom_call.1} parent=1 // pred_region
      _
    $region5: #{tpu_custom_call.1} parent=1 // pred_fallthru
      _
    // Predicated region
    $region6: #{tpu_custom_call.1} parent=1 // pred_check
      _
    $region7: #{tpu_custom_call.1} parent=1 // pred_check_branch
      %11 = sbr.rel (0) target = $region9
    $region8: #{tpu_custom_call.1} parent=1 // pred_region
      _
    $region9: #{tpu_custom_call.1} parent=1 // pred_fallthru
      _
    %v12 = vld [vmem:[%s0] sm:$0xff]
    %v13 = vld [vmem:[%s1] sm:$0xff]
    %vm14 = vcmask 261120
    %v15 = vsel %vm14, %v12, -inf
    %16 = vmax.xlane.f32.xlu0 %v15
    %v17 = vpop.xlane.xlu0 %16
    %v18 = vsub.f32 %v12, %v17
    %v19 = vmul.f32 %v18, 1.442695
    %v20 = vpow.pop %v19
    %v21 = vsel %vm14, %v20, 0.0
    %22 = vadd.xlane.f32.xlu0 %v21
    %v23 = vpop.xlane.xlu0 %22
    %v24 = vlog2.pop %v23
    %v25 = vmul.f32 %v24, 0.6931472
    %v26 = vlaneseq
    %v27 = vand.u32 %v26, 127
    %28 = vset.pattern.permute.xlu0 0
    %29 = vperm.xlu0 %28, %v13
    %v30 = vpop.permute.xlu0 %29
    %vm31 = vcmp.eq.s32.totalorder %v27, %v30
    %v32 = vsel %vm31, %v18, 0.0
    %v33 = vsel %vm14, %v32, 0.0
    %34 = vadd.xlane.f32.xlu0 %v33
    %v35 = vpop.xlane.xlu0 %34
    %v36 = vsub.f32 %v25, %v35
    %v37 = vsub.f32 0.0, %v36
    %v38 = vmul.f32 %v37, 1.442695
    %v39 = vpow.pop %v38
    %v40 = vsub.f32 1.0, %v39
    %v41 = vmul.f32 %v40, %v40
    %v42 = vmul.f32 %v41, %v36
    %vm43 = vcmask 7168
    %v44 = vsel %vm43, %v42, 0.0
    %45 = vadd.xlane.f32.xlu0 %v44
    %v46 = vpop.xlane.xlu0 %45
    %v47 = vrot.slane %v46, 4
    %v48 = vadd.f32 %v46, %v47
    %v49 = vrot.slane %v48, 2
    %v50 = vadd.f32 %v48, %v49
    %v51 = vrot.slane %v50, 1
    %v52 = vadd.f32 %v50, %v51
    %s53 = vtos %v52
    %v54 = vstv %s53
    %55 = vst [vmem:[#allocation2] sm:$0x1] %v54
    // Predicated region
    $region10: #{tpu_custom_call.1} parent=1 // pred_check
      _
    $region11: #{tpu_custom_call.1} parent=1 // pred_check_branch
      %57 = sbr.rel (0) target = $region13
    $region12: #{tpu_custom_call.1} parent=1 // pred_region
      %s59 = ssub.s32 16, 16
      %60 = vsyncadd [#allocation3], %s59
      %s62 = sshll.u32 [#allocation2], 4
      %s63 = int_to_ptr.vmem [resolvable:$true] %s62
      %65 = dma.vmem_to_hbm [thread:$0]  %s63, 16, %s2, [#allocation3]
    $region13: #{tpu_custom_call.1} parent=1 // pred_fallthru
      _
    // Predicated region
    $region14: #{tpu_custom_call.1} parent=1 // pred_check
      _
    $region15: #{tpu_custom_call.1} parent=1 // pred_check_branch
      %67 = sbr.rel (0) target = $region17
    $region16: #{tpu_custom_call.1} parent=1 // pred_region
      %68 = dma.done [#allocation3], 16
    $region17: #{tpu_custom_call.1} parent=1 // pred_fallthru
      _
    %69 = vsyncpa [#allocation3], 1

</llo_original>
